<compile_context>
chip_gen: v5e
topology: v5e:2x2
jax: 0.10.0
libtpu: 0.0.40
codegen_flags: <defaults>
</compile_context>

<pallas_src>
import jax
import jax.numpy as jnp
from jax.experimental import pallas as pl
from jax.experimental.pallas import tpu as pltpu


def _round_up(x, m):
    return (x + m - 1) // m * m


def _mlp_kernel(x_ref,
                w1_ref, b1_ref,
                w2_ref, b2_ref,
                w3_ref, b3_ref,
                w4_ref, b4_ref,
                o_ref):
    """Full fused forward pass on one batch tile.

    All feature dims stay at their natural (unpadded) widths: sub-128-lane
    intermediates use the same number of vregs as 128-padded ones, so padding
    would only add HBM traffic.  Matmul operands use the weights' dtype
    (f32 or bf16) with f32 accumulation; bias adds stay f32.
    """
    mx_dtype = w1_ref.dtype

    def dense(h, w_ref, b_ref):
        # MXU matmul, f32 accumulate, f32 bias add.
        return jnp.dot(h, w_ref[...], preferred_element_type=jnp.float32) + b_ref[...]

    def sigmoid(z):
        # tanh form: a single EUP push per activation instead of exp + divide.
        # On the bf16 path the activation runs in bf16 (packed EUP on v6e/v7x,
        # harmlessly widened on v5e); on the f32 path this is exact f32 sigmoid.
        z = z.astype(mx_dtype)
        return (0.5 * jnp.tanh(0.5 * z) + 0.5).astype(mx_dtype)

    h = x_ref[...].astype(mx_dtype)          # no-op: wrapper already matches dtype
    h = sigmoid(dense(h, w1_ref, b1_ref))
    h = sigmoid(dense(h, w2_ref, b2_ref))
    h = sigmoid(dense(h, w3_ref, b3_ref))
    o_ref[...] = dense(h, w4_ref, b4_ref).astype(o_ref.dtype)


def net_forward(x, params, *, batch_tile=None, matmul_dtype=jnp.float32,
                out_dtype=jnp.float32):
    """Pallas wrapper.

    x: [B, n_feature] float.
    params: dict with w1..w4 ([in, out]) and b1..b4 ([out]).
    matmul_dtype: dtype of MXU operands / activations (bf16 recommended on v6e/v7x).
    """
    B, n_feature = x.shape
    ws = [params[f"w{i}"].astype(matmul_dtype) for i in range(1, 5)]
    bs = [params[f"b{i}"].astype(jnp.float32).reshape(1, -1) for i in range(1, 5)]
    n_output = ws[3].shape[1]

    # Cast x once in the wrapper on the bf16 path -> halves the dominant input DMA.
    if x.dtype != matmul_dtype:
        x = x.astype(matmul_dtype)

    # Batch tiling.  Big tiles amortize the ~0.35 us per-grid-step overhead; cap at
    # ~B/2 so the 'parallel' batch axis yields grid >= 2 (both TensorCores on v7x).
    sub = 16 if matmul_dtype == jnp.bfloat16 else 8   # sublane packing alignment
    if batch_tile is None:
        batch_tile = 4096
        if B > sub:
            batch_tile = min(batch_tile, _round_up(pl.cdiv(B, 2), sub))
    batch_tile = max(sub, _round_up(batch_tile, sub))
    if batch_tile >= B:
        batch_tile = B      # single full-extent block: always a legal block shape

    grid = (pl.cdiv(B, batch_tile),)
    # NOTE: the grid need not evenly divide B.  The ragged last block is clipped by
    # the pipeline DMAs: pad rows of the input buffer hold stale/garbage data, but
    # each output row depends only on its own input row, and out-of-bounds output
    # rows are dropped on writeback -- so no padded copy of x is ever materialized.

    def const_spec(arr):
        # Weights/biases: constant block index -> DMA'd once, resident in VMEM.
        # (They total a few tens of KB, so the default double buffer is harmless.)
        return pl.BlockSpec(arr.shape, lambda i: (0, 0))

    out = pl.pallas_call(
        _mlp_kernel,
        out_shape=jax.ShapeDtypeStruct((B, n_output), out_dtype),
        grid_spec=pltpu.PrefetchScalarGridSpec(
            num_scalar_prefetch=0,
            grid=grid,
            in_specs=[
                pl.BlockSpec((batch_tile, n_feature), lambda i: (i, 0)),   # x tile
                const_spec(ws[0]), const_spec(bs[0]),
                const_spec(ws[1]), const_spec(bs[1]),
                const_spec(ws[2]), const_spec(bs[2]),
                const_spec(ws[3]), const_spec(bs[3]),
            ],
            out_specs=pl.BlockSpec((batch_tile, n_output), lambda i: (i, 0)),
        ),
        compiler_params=pltpu.CompilerParams(
            dimension_semantics=("parallel",),      # batch tiles shard across TCs (v7x)
            vmem_limit_bytes=32 * 1024 * 1024,      # explicit; safe on v5e/v6e/v7x
        ),
    )(x, ws[0], bs[0], ws[1], bs[1], ws[2], bs[2], ws[3], bs[3])

    return out


def init_params(key, n_feature, n_hidden, n_hidden2, n_hidden3, n_output):
    """Deterministic init mimicking PyTorch's default Linear init U[-1/sqrt(fan_in), +]."""
    dims = [(n_feature, n_hidden), (n_hidden, n_hidden2),
            (n_hidden2, n_hidden3), (n_hidden3, n_output)]
    params = {}
    for idx, (fan_in, fan_out) in enumerate(dims, start=1):
        key, kw, kb = jax.random.split(key, 3)
        bound = 1.0 / (fan_in ** 0.5)
        params[f"w{idx}"] = jax.random.uniform(
            kw, (fan_in, fan_out), jnp.float32, -bound, bound)
        params[f"b{idx}"] = jax.random.uniform(
            kb, (fan_out,), jnp.float32, -bound, bound)
    return params


def _reference_forward(x, params):
    h = jax.nn.sigmoid(x @ params["w1"] + params["b1"])
    h = jax.nn.sigmoid(h @ params["w2"] + params["b2"])
    h = jax.nn.sigmoid(h @ params["w3"] + params["b3"])
    return h @ params["w4"] + params["b4"]


if __name__ == "__main__":
    # Small shapes consistent with Net(n_feature, n_hidden, n_hidden2, n_hidden3, n_output)
    B = 8
    n_feature, n_hidden, n_hidden2, n_hidden3, n_output = 16, 32, 64, 32, 4

    key = jax.random.PRNGKey(0)
    key, kx = jax.random.split(key)
    x = jax.random.normal(kx, (B, n_feature), jnp.float32)
    params = init_params(key, n_feature, n_hidden, n_hidden2, n_hidden3, n_output)

    ref = _reference_forward(x, params)

    # 1) f32 MXU path -- tight correctness check (single full-extent block, grid=1).
    out = jax.block_until_ready(net_forward(x, params))
    assert out.shape == (B, n_output)
    assert jnp.allclose(out, ref, atol=5e-5, rtol=5e-5), "f32 mismatch vs JAX reference"

    # 2) bf16 MXU-operand + bf16-activation path (v6e/v7x recommendation) -- loose tol.
    out_bf16 = jax.block_until_ready(
        net_forward(x, params, matmul_dtype=jnp.bfloat16))
    assert jnp.allclose(out_bf16, ref, atol=5e-2, rtol=5e-2), "bf16 mismatch vs JAX reference"

    # 3) Non-multiple batch: grid=2 ('parallel' axis -> both TCs on v7x), ragged last
    #    tile handled by clipped boundary blocks (no padded copy of x).
    key, kx2 = jax.random.split(key)
    x_big = jax.random.normal(kx2, (1030, n_feature), jnp.float32)
    ref_big = _reference_forward(x_big, params)

    out_big = jax.block_until_ready(net_forward(x_big, params))
    assert out_big.shape == (1030, n_output)
    assert jnp.allclose(out_big, ref_big, atol=5e-5, rtol=5e-5), "tiled f32 mismatch"

    out_big_bf16 = jax.block_until_ready(
        net_forward(x_big, params, matmul_dtype=jnp.bfloat16))
    assert jnp.allclose(out_big_bf16, ref_big, atol=5e-2, rtol=5e-2), "tiled bf16 mismatch"

    print("KERNEL_OK")
</pallas_src>

<mosaic_0001>
module attributes {stable_mosaic.version = 11 : i64} {
  func.func @_mlp_kernel(%arg0: i32, %arg1: memref<8x16xf32, #tpu.memory_space<vmem>>, %arg2: memref<16x32xf32, #tpu.memory_space<vmem>>, %arg3: memref<1x32xf32, #tpu.memory_space<vmem>>, %arg4: memref<32x64xf32, #tpu.memory_space<vmem>>, %arg5: memref<1x64xf32, #tpu.memory_space<vmem>>, %arg6: memref<64x32xf32, #tpu.memory_space<vmem>>, %arg7: memref<1x32xf32, #tpu.memory_space<vmem>>, %arg8: memref<32x4xf32, #tpu.memory_space<vmem>>, %arg9: memref<1x4xf32, #tpu.memory_space<vmem>>, %arg10: memref<8x4xf32, #tpu.memory_space<vmem>>) attributes {dimension_semantics = [#tpu.dimension_semantics<parallel>], iteration_bounds = array<i64: 1>, scalar_prefetch = 0 : i64, scratch_operands = 0 : i64, tpu.core_type = #tpu.core_type<tc>, window_params = [{transform_indices = @transform_0, window_bounds = array<i64: 8, 16>}, {pipeline_mode = #tpu.pipeline_mode<synchronous>, transform_indices = @transform_1, window_bounds = array<i64: 16, 32>}, {pipeline_mode = #tpu.pipeline_mode<synchronous>, transform_indices = @transform_2, window_bounds = array<i64: 1, 32>}, {pipeline_mode = #tpu.pipeline_mode<synchronous>, transform_indices = @transform_3, window_bounds = array<i64: 32, 64>}, {pipeline_mode = #tpu.pipeline_mode<synchronous>, transform_indices = @transform_4, window_bounds = array<i64: 1, 64>}, {pipeline_mode = #tpu.pipeline_mode<synchronous>, transform_indices = @transform_5, window_bounds = array<i64: 64, 32>}, {pipeline_mode = #tpu.pipeline_mode<synchronous>, transform_indices = @transform_6, window_bounds = array<i64: 1, 32>}, {pipeline_mode = #tpu.pipeline_mode<synchronous>, transform_indices = @transform_7, window_bounds = array<i64: 32, 4>}, {pipeline_mode = #tpu.pipeline_mode<synchronous>, transform_indices = @transform_8, window_bounds = array<i64: 1, 4>}, {transform_indices = @transform_9, window_bounds = array<i64: 8, 4>}]} {
    %c0 = arith.constant 0 : index
    %c0_0 = arith.constant 0 : index
    %0 = vector.load %arg1[%c0, %c0_0] : memref<8x16xf32, #tpu.memory_space<vmem>>, vector<8x16xf32>
    %c0_1 = arith.constant 0 : index
    %c0_2 = arith.constant 0 : index
    %1 = vector.load %arg2[%c0_1, %c0_2] : memref<16x32xf32, #tpu.memory_space<vmem>>, vector<16x32xf32>
    %cst = arith.constant dense<0.000000e+00> : vector<8x32xf32>
    %2 = tpu.matmul %0, %1, %cst {dimension_numbers = #tpu.dot_dimension_numbers<[1], [0], [0], [1], [0, 0, 1, 1], [], []>} : vector<8x16xf32>, vector<16x32xf32>, vector<8x32xf32> -> vector<8x32xf32>
    %c0_3 = arith.constant 0 : index
    %c0_4 = arith.constant 0 : index
    %3 = vector.load %arg3[%c0_3, %c0_4] : memref<1x32xf32, #tpu.memory_space<vmem>>, vector<1x32xf32>
    %4 = vector.broadcast %3 : vector<1x32xf32> to vector<8x32xf32>
    %5 = arith.addf %2, %4 : vector<8x32xf32>
    %cst_5 = arith.constant 5.000000e-01 : f32
    %6 = vector.broadcast %cst_5 : f32 to vector<8x32xf32>
    %7 = arith.mulf %6, %5 : vector<8x32xf32>
    %8 = math.tanh %7 : vector<8x32xf32>
    %cst_6 = arith.constant 5.000000e-01 : f32
    %9 = vector.broadcast %cst_6 : f32 to vector<8x32xf32>
    %10 = arith.mulf %9, %8 : vector<8x32xf32>
    %cst_7 = arith.constant 5.000000e-01 : f32
    %11 = vector.broadcast %cst_7 : f32 to vector<8x32xf32>
    %12 = arith.addf %10, %11 : vector<8x32xf32>
    %c0_8 = arith.constant 0 : index
    %c0_9 = arith.constant 0 : index
    %13 = vector.load %arg4[%c0_8, %c0_9] : memref<32x64xf32, #tpu.memory_space<vmem>>, vector<32x64xf32>
    %cst_10 = arith.constant dense<0.000000e+00> : vector<8x64xf32>
    %14 = tpu.matmul %12, %13, %cst_10 {dimension_numbers = #tpu.dot_dimension_numbers<[1], [0], [0], [1], [0, 0, 1, 1], [], []>} : vector<8x32xf32>, vector<32x64xf32>, vector<8x64xf32> -> vector<8x64xf32>
    %c0_11 = arith.constant 0 : index
    %c0_12 = arith.constant 0 : index
    %15 = vector.load %arg5[%c0_11, %c0_12] : memref<1x64xf32, #tpu.memory_space<vmem>>, vector<1x64xf32>
    %16 = vector.broadcast %15 : vector<1x64xf32> to vector<8x64xf32>
    %17 = arith.addf %14, %16 : vector<8x64xf32>
    %cst_13 = arith.constant 5.000000e-01 : f32
    %18 = vector.broadcast %cst_13 : f32 to vector<8x64xf32>
    %19 = arith.mulf %18, %17 : vector<8x64xf32>
    %20 = math.tanh %19 : vector<8x64xf32>
    %cst_14 = arith.constant 5.000000e-01 : f32
    %21 = vector.broadcast %cst_14 : f32 to vector<8x64xf32>
    %22 = arith.mulf %21, %20 : vector<8x64xf32>
    %cst_15 = arith.constant 5.000000e-01 : f32
    %23 = vector.broadcast %cst_15 : f32 to vector<8x64xf32>
    %24 = arith.addf %22, %23 : vector<8x64xf32>
    %c0_16 = arith.constant 0 : index
    %c0_17 = arith.constant 0 : index
    %25 = vector.load %arg6[%c0_16, %c0_17] : memref<64x32xf32, #tpu.memory_space<vmem>>, vector<64x32xf32>
    %cst_18 = arith.constant dense<0.000000e+00> : vector<8x32xf32>
    %26 = tpu.matmul %24, %25, %cst_18 {dimension_numbers = #tpu.dot_dimension_numbers<[1], [0], [0], [1], [0, 0, 1, 1], [], []>} : vector<8x64xf32>, vector<64x32xf32>, vector<8x32xf32> -> vector<8x32xf32>
    %c0_19 = arith.constant 0 : index
    %c0_20 = arith.constant 0 : index
    %27 = vector.load %arg7[%c0_19, %c0_20] : memref<1x32xf32, #tpu.memory_space<vmem>>, vector<1x32xf32>
    %28 = vector.broadcast %27 : vector<1x32xf32> to vector<8x32xf32>
    %29 = arith.addf %26, %28 : vector<8x32xf32>
    %cst_21 = arith.constant 5.000000e-01 : f32
    %30 = vector.broadcast %cst_21 : f32 to vector<8x32xf32>
    %31 = arith.mulf %30, %29 : vector<8x32xf32>
    %32 = math.tanh %31 : vector<8x32xf32>
    %cst_22 = arith.constant 5.000000e-01 : f32
    %33 = vector.broadcast %cst_22 : f32 to vector<8x32xf32>
    %34 = arith.mulf %33, %32 : vector<8x32xf32>
    %cst_23 = arith.constant 5.000000e-01 : f32
    %35 = vector.broadcast %cst_23 : f32 to vector<8x32xf32>
    %36 = arith.addf %34, %35 : vector<8x32xf32>
    %c0_24 = arith.constant 0 : index
    %c0_25 = arith.constant 0 : index
    %37 = vector.load %arg8[%c0_24, %c0_25] : memref<32x4xf32, #tpu.memory_space<vmem>>, vector<32x4xf32>
    %cst_26 = arith.constant dense<0.000000e+00> : vector<8x4xf32>
    %38 = tpu.matmul %36, %37, %cst_26 {dimension_numbers = #tpu.dot_dimension_numbers<[1], [0], [0], [1], [0, 0, 1, 1], [], []>} : vector<8x32xf32>, vector<32x4xf32>, vector<8x4xf32> -> vector<8x4xf32>
    %c0_27 = arith.constant 0 : index
    %c0_28 = arith.constant 0 : index
    %39 = vector.load %arg9[%c0_27, %c0_28] : memref<1x4xf32, #tpu.memory_space<vmem>>, vector<1x4xf32>
    %40 = vector.broadcast %39 : vector<1x4xf32> to vector<8x4xf32>
    %41 = arith.addf %38, %40 : vector<8x4xf32>
    %c0_29 = arith.constant 0 : index
    %c0_30 = arith.constant 0 : index
    %42 = vector.load %arg10[%c0_29, %c0_30] : memref<8x4xf32, #tpu.memory_space<vmem>>, vector<8x4xf32>
    tpu.vector_store %arg10[%c0_29, %c0_30], %41 {strides = array<i32>} : memref<8x4xf32, #tpu.memory_space<vmem>>, vector<8x4xf32>,
    return
  }
  func.func @transform_0(%arg0: i32) -> (i32, i32) {
    %c0_i32 = arith.constant 0 : i32
    %c0_i32_0 = arith.constant 0 : i32
    return %arg0, %c0_i32 : i32, i32
  }
  func.func @transform_1(%arg0: i32) -> (i32, i32) {
    %c0_i32 = arith.constant 0 : i32
    %c0_i32_0 = arith.constant 0 : i32
    %c0_i32_1 = arith.constant 0 : i32
    return %c0_i32, %c0_i32_0 : i32, i32
  }
  func.func @transform_2(%arg0: i32) -> (i32, i32) {
    %c0_i32 = arith.constant 0 : i32
    %c0_i32_0 = arith.constant 0 : i32
    %c0_i32_1 = arith.constant 0 : i32
    return %c0_i32, %c0_i32_0 : i32, i32
  }
  func.func @transform_3(%arg0: i32) -> (i32, i32) {
    %c0_i32 = arith.constant 0 : i32
    %c0_i32_0 = arith.constant 0 : i32
    %c0_i32_1 = arith.constant 0 : i32
    return %c0_i32, %c0_i32_0 : i32, i32
  }
  func.func @transform_4(%arg0: i32) -> (i32, i32) {
    %c0_i32 = arith.constant 0 : i32
    %c0_i32_0 = arith.constant 0 : i32
    %c0_i32_1 = arith.constant 0 : i32
    return %c0_i32, %c0_i32_0 : i32, i32
  }
  func.func @transform_5(%arg0: i32) -> (i32, i32) {
    %c0_i32 = arith.constant 0 : i32
    %c0_i32_0 = arith.constant 0 : i32
    %c0_i32_1 = arith.constant 0 : i32
    return %c0_i32, %c0_i32_0 : i32, i32
  }
  func.func @transform_6(%arg0: i32) -> (i32, i32) {
    %c0_i32 = arith.constant 0 : i32
    %c0_i32_0 = arith.constant 0 : i32
    %c0_i32_1 = arith.constant 0 : i32
    return %c0_i32, %c0_i32_0 : i32, i32
  }
  func.func @transform_7(%arg0: i32) -> (i32, i32) {
    %c0_i32 = arith.constant 0 : i32
    %c0_i32_0 = arith.constant 0 : i32
    %c0_i32_1 = arith.constant 0 : i32
    return %c0_i32, %c0_i32_0 : i32, i32
  }
  func.func @transform_8(%arg0: i32) -> (i32, i32) {
    %c0_i32 = arith.constant 0 : i32
    %c0_i32_0 = arith.constant 0 : i32
    %c0_i32_1 = arith.constant 0 : i32
    return %c0_i32, %c0_i32_0 : i32, i32
  }
  func.func @transform_9(%arg0: i32) -> (i32, i32) {
    %c0_i32 = arith.constant 0 : i32
    %c0_i32_0 = arith.constant 0 : i32
    return %arg0, %c0_i32 : i32, i32
  }
}

</mosaic_0001>

<llo_original>
// kernel: tpu_custom_call.1
$region0: #{tpu_custom_call.1}
  #allocation0 [shape = 'u32[]', space=smem, size = 0x4, offset = 0x4, fixed_abs, tag = 'smem constant byte address 0x4 - core index']
  #allocation1 [shape = 'u32[72,128]{1,0:T(1,128)}', space=vmem, size = 0x9000, scoped, tag = 'internal scratch']
  %s0 = inlined_call_operand.vmem [shape: f32[8,16], index: 0, kind: input, shape index: {}]
  %s1 = inlined_call_operand.vmem [shape: f32[16,32], index: 1, kind: input, shape index: {}]
  %s2 = inlined_call_operand.vmem [shape: f32[1,32], index: 2, kind: input, shape index: {}]
  %s3 = inlined_call_operand.vmem [shape: f32[32,64], index: 3, kind: input, shape index: {}]
  %s4 = inlined_call_operand.vmem [shape: f32[1,64], index: 4, kind: input, shape index: {}]
  %s5 = inlined_call_operand.vmem [shape: f32[64,32], index: 5, kind: input, shape index: {}]
  %s6 = inlined_call_operand.vmem [shape: f32[1,32], index: 6, kind: input, shape index: {}]
  %s7 = inlined_call_operand.vmem [shape: f32[32,4], index: 7, kind: input, shape index: {}]
  %s8 = inlined_call_operand.vmem [shape: f32[1,4], index: 8, kind: input, shape index: {}]
  %s9 = inlined_call_operand.vmem [shape: f32[8,4], index: 9, kind: output, shape index: {}]
  %s10 = sld [smem:[#allocation0]]
  $region46: #{tpu_custom_call.1} parent=0
    _
  %s12 = ssub.s32 1, %s10
  %s13 = scalar_select 0, %s12, %s10
  // Predicated region
  $region2: #{tpu_custom_call.1} parent=0 // pred_check
    _
  $region3: #{tpu_custom_call.1} parent=0 // pred_check_branch
    %15 = sbr.rel (0) target = $region5
  $region4: #{tpu_custom_call.1} parent=0 // pred_region
    _
  $region5: #{tpu_custom_call.1} parent=0 // pred_fallthru
    _
  // Predicated region
  $region6: #{tpu_custom_call.1} parent=0 // pred_check
    _
  $region7: #{tpu_custom_call.1} parent=0 // pred_check_branch
    %17 = sbr.rel (0) target = $region9
  $region8: #{tpu_custom_call.1} parent=0 // pred_region
    _
  $region9: #{tpu_custom_call.1} parent=0 // pred_fallthru
    _
  // Predicated region
  $region10: #{tpu_custom_call.1} parent=0 // pred_check
    _
  $region11: #{tpu_custom_call.1} parent=0 // pred_check_branch
    %19 = sbr.rel (0) target = $region13
  $region12: #{tpu_custom_call.1} parent=0 // pred_region
    _
  $region13: #{tpu_custom_call.1} parent=0 // pred_fallthru
    _
  // Predicated region
  $region14: #{tpu_custom_call.1} parent=0 // pred_check
    _
  $region15: #{tpu_custom_call.1} parent=0 // pred_check_branch
    %21 = sbr.rel (0) target = $region17
  $region16: #{tpu_custom_call.1} parent=0 // pred_region
    _
  $region17: #{tpu_custom_call.1} parent=0 // pred_fallthru
    _
  // Predicated region
  $region18: #{tpu_custom_call.1} parent=0 // pred_check
    _
  $region19: #{tpu_custom_call.1} parent=0 // pred_check_branch
    %23 = sbr.rel (0) target = $region21
  $region20: #{tpu_custom_call.1} parent=0 // pred_region
    _
  $region21: #{tpu_custom_call.1} parent=0 // pred_fallthru
    _
  // Predicated region
  $region22: #{tpu_custom_call.1} parent=0 // pred_check
    _
  $region23: #{tpu_custom_call.1} parent=0 // pred_check_branch
    %25 = sbr.rel (0) target = $region25
  $region24: #{tpu_custom_call.1} parent=0 // pred_region
    _
  $region25: #{tpu_custom_call.1} parent=0 // pred_fallthru
    _
  // Predicated region
  $region26: #{tpu_custom_call.1} parent=0 // pred_check
    _
  $region27: #{tpu_custom_call.1} parent=0 // pred_check_branch
    %27 = sbr.rel (0) target = $region29
  $region28: #{tpu_custom_call.1} parent=0 // pred_region
    _
  $region29: #{tpu_custom_call.1} parent=0 // pred_fallthru
    _
  // Predicated region
  $region30: #{tpu_custom_call.1} parent=0 // pred_check
    _
  $region31: #{tpu_custom_call.1} parent=0 // pred_check_branch
    %29 = sbr.rel (0) target = $region33
  $region32: #{tpu_custom_call.1} parent=0 // pred_region
    _
  $region33: #{tpu_custom_call.1} parent=0 // pred_fallthru
    _
  // Predicated region
  $region34: #{tpu_custom_call.1} parent=0 // pred_check
    _
  $region35: #{tpu_custom_call.1} parent=0 // pred_check_branch
    %31 = sbr.rel (0) target = $region37
  $region36: #{tpu_custom_call.1} parent=0 // pred_region
    _
  $region37: #{tpu_custom_call.1} parent=0 // pred_fallthru
    _
  %v32 = vld [vmem:[%s0] sm:$0xff]
  %v33 = vld [vmem:[%s1] sm:$0xff]
  %v34 = vld [vmem:[%s1 + $0x8] sm:$0xff]
  %v35 = vld [vmem:[%s2] sm:$0x1]
  %v37 = vperm.slane %v35, 0
  %vm39 = vcmask 130048
  %v41 = vsel %vm39, %v32, 0
  %43 = vmatpush.msra.mxu0 0.0
  %44 = vmatpush.msra.mxu0 0.0
  %45 = vmatpush.msra.mxu0 0.0
  %46 = vmatpush.msra.mxu0 0.0
  %47 = vmatpush.msra.mxu0 0.0
  %48 = vmatpush.msra.mxu0 0.0
  %49 = vmatpush.msra.mxu0 0.0
  %50 = vmatpush.msra.mxu0 0.0
  %51 = vmatpush.msra.mxu0 0.0
  %52 = vmatpush.msra.mxu0 0.0
  %53 = vmatpush.msra.mxu0 0.0
  %54 = vmatpush.msra.mxu0 0.0
  %55 = vmatpush.msra.mxu0 0.0
  %56 = vmatpush.msra.mxu0 0.0
  %57 = vmatpush.msra.mxu0 %v34
  %58 = vmatpush.msra.mxu0 %v33
  %59 = vmatmul.f32.gmra.mxu0 %v41
  %v60 = vpop.f32.mrf.mxu0
  %v61 = vadd.f32 %v37, %v60
  %62 = vdwg.mxu0
  %v63 = vmul.f32 %v61, 0.5
  %v64 = vtanh.pop %v63
  %v65 = vmul.f32 %v64, 0.5
  %v66 = vadd.f32 %v65, 0.5
  %v67 = vld [vmem:[%s3] sm:$0xff]
  %v68 = vld [vmem:[%s3 + $0x8] sm:$0xff]
  %v69 = vld [vmem:[%s3 + $0x10] sm:$0xff]
  %v70 = vld [vmem:[%s3 + $0x18] sm:$0xff]
  %v71 = vld [vmem:[%s4] sm:$0x1]
  %v73 = vperm.slane %v71, 0
  %vm75 = vcmask 261120
  %v77 = vsel %vm75, %v66, 0
  %79 = vmatpush.msra.mxu0 0.0
  %80 = vmatpush.msra.mxu0 0.0
  %81 = vmatpush.msra.mxu0 0.0
  %82 = vmatpush.msra.mxu0 0.0
  %83 = vmatpush.msra.mxu0 0.0
  %84 = vmatpush.msra.mxu0 0.0
  %85 = vmatpush.msra.mxu0 0.0
  %86 = vmatpush.msra.mxu0 0.0
  %87 = vmatpush.msra.mxu0 0.0
  %88 = vmatpush.msra.mxu0 0.0
  %89 = vmatpush.msra.mxu0 0.0
  %90 = vmatpush.msra.mxu0 0.0
  %91 = vmatpush.msra.mxu0 %v70
  %92 = vmatpush.msra.mxu0 %v69
  %93 = vmatpush.msra.mxu0 %v68
  %94 = vmatpush.msra.mxu0 %v67
  %95 = vmatmul.f32.gmra.mxu0 %v77
  %v96 = vpop.f32.mrf.mxu0
  %v97 = vadd.f32 %v73, %v96
  %98 = vdwg.mxu0
  %v99 = vmul.f32 %v97, 0.5
  %v100 = vtanh.pop %v99
  %v101 = vmul.f32 %v100, 0.5
  %v102 = vadd.f32 %v101, 0.5
  %v103 = vld [vmem:[%s5] sm:$0xff]
  %v104 = vld [vmem:[%s5 + $0x8] sm:$0xff]
  %v105 = vld [vmem:[%s5 + $0x10] sm:$0xff]
  %v106 = vld [vmem:[%s5 + $0x18] sm:$0xff]
  %v107 = vld [vmem:[%s5 + $0x20] sm:$0xff]
  %v108 = vld [vmem:[%s5 + $0x28] sm:$0xff]
  %v109 = vld [vmem:[%s5 + $0x30] sm:$0xff]
  %v110 = vld [vmem:[%s5 + $0x38] sm:$0xff]
  %v111 = vld [vmem:[%s6] sm:$0x1]
  %v113 = vperm.slane %v111, 0
  %vm115 = vcmask 523264
  %v117 = vsel %vm115, %v102, 0
  %119 = vmatpush.msra.mxu0 0.0
  %120 = vmatpush.msra.mxu0 0.0
  %121 = vmatpush.msra.mxu0 0.0
  %122 = vmatpush.msra.mxu0 0.0
  %123 = vmatpush.msra.mxu0 0.0
  %124 = vmatpush.msra.mxu0 0.0
  %125 = vmatpush.msra.mxu0 0.0
  %126 = vmatpush.msra.mxu0 0.0
  %127 = vmatpush.msra.mxu0 %v110
  %128 = vmatpush.msra.mxu0 %v109
  %129 = vmatpush.msra.mxu0 %v108
  %130 = vmatpush.msra.mxu0 %v107
  %131 = vmatpush.msra.mxu0 %v106
  %132 = vmatpush.msra.mxu0 %v105
  %133 = vmatpush.msra.mxu0 %v104
  %134 = vmatpush.msra.mxu0 %v103
  %135 = vmatmul.f32.gmra.mxu0 %v117
  %v136 = vpop.f32.mrf.mxu0
  %v137 = vadd.f32 %v113, %v136
  %138 = vdwg.mxu0
  %v139 = vmul.f32 %v137, 0.5
  %v140 = vtanh.pop %v139
  %v141 = vmul.f32 %v140, 0.5
  %v142 = vadd.f32 %v141, 0.5
  %v143 = vld [vmem:[%s7] sm:$0xff]
  %v144 = vld [vmem:[%s7 + $0x8] sm:$0xff]
  %v145 = vld [vmem:[%s7 + $0x10] sm:$0xff]
  %v146 = vld [vmem:[%s7 + $0x18] sm:$0xff]
  %v147 = vld [vmem:[%s8] sm:$0x1]
  %v149 = vperm.slane %v147, 0
  %v152 = vsel %vm75, %v142, 0
  %154 = vmatpush.msra.mxu0 0.0
  %155 = vmatpush.msra.mxu0 0.0
  %156 = vmatpush.msra.mxu0 0.0
  %157 = vmatpush.msra.mxu0 0.0
  %158 = vmatpush.msra.mxu0 0.0
  %159 = vmatpush.msra.mxu0 0.0
  %160 = vmatpush.msra.mxu0 0.0
  %161 = vmatpush.msra.mxu0 0.0
  %162 = vmatpush.msra.mxu0 0.0
  %163 = vmatpush.msra.mxu0 0.0
  %164 = vmatpush.msra.mxu0 0.0
  %165 = vmatpush.msra.mxu0 0.0
  %166 = vmatpush.msra.mxu0 %v146
  %167 = vmatpush.msra.mxu0 %v145
  %168 = vmatpush.msra.mxu0 %v144
  %169 = vmatpush.msra.mxu0 %v143
  %170 = vmatmul.f32.gmra.mxu0 %v152
  %v171 = vpop.f32.mrf.mxu0
  %v172 = vadd.f32 %v149, %v171
  %173 = vdwg.mxu0
  %vm174 = vcmask 31744
  %175 = vst.msk [vmem:[%s9] sm:$0xff] %vm174, %v172
  // Predicated region
  $region38: #{tpu_custom_call.1} parent=0 // pred_check
    _
  $region39: #{tpu_custom_call.1} parent=0 // pred_check_branch
    %177 = sbr.rel (0) target = $region41
  $region40: #{tpu_custom_call.1} parent=0 // pred_region
    _
  $region41: #{tpu_custom_call.1} parent=0 // pred_fallthru
    _
  // Predicated region
  $region42: #{tpu_custom_call.1} parent=0 // pred_check
    _
  $region43: #{tpu_custom_call.1} parent=0 // pred_check_branch
    %179 = sbr.rel (0) target = $region45
  $region44: #{tpu_custom_call.1} parent=0 // pred_region
    _
  $region45: #{tpu_custom_call.1} parent=0 // pred_fallthru
    _

</llo_original>
